<compile_context>
chip_gen: v7x
topology: tpu7x:2x2x1
jax: 0.10.0
libtpu: 0.0.40
codegen_flags: <defaults>
</compile_context>

<pallas_src>
import functools

import jax
import jax.numpy as jnp
from jax.experimental import pallas as pl
from jax.experimental.pallas import tpu as pltpu

_LANE = 128      # vreg lane width
_SUBLANE = 8     # vreg sublane count


def _vmem_limit_bytes():
    """Per-generation scoped-VMEM limit: ~96-100 MiB on 128 MiB parts (v5e/v6e),
    ~48 MiB on 64 MiB parts (v7x). Conservative 64 MiB default if the query fails."""
    cap = 64 * 2**20
    try:
        cap = int(getattr(pltpu.get_tpu_info(), "vmem_capacity_bytes", cap))
    except Exception:
        pass
    return min((cap * 3) // 4, 100 * 2**20)


def _tile_candidates(n, unit):
    """Descending tile sizes dividing n that are multiples of `unit` (8 for a
    sublane dim, 128 for a lane dim). Falls back to the full extent (always a
    legal block) when nothing else divides or when n itself is small."""
    cands = [t for t in (512, 256, 128, 64, 32, 16, 8)
             if t % unit == 0 and t <= n and n % t == 0]
    if not cands or n <= 512:
        cands.append(n)
    # TODO(synk): for long non-128-divisible sequences, pad to a multiple of 128
    # (with -inf masking of the padded keys) instead of one full-extent block.
    return sorted(set(cands), reverse=True)


def _full_path_config(BH, Lq, Dk, Ls, Dv, dsize, budget):
    """(HB heads/step, TQ q-rows/step) for the attn-returning path. Accounts for
    double-buffered in/out blocks plus fp32 score/softmax temporaries; prefers
    >=4 grid steps (pipeline overlap, v7x megacore), then the largest block."""
    tq_cands = _tile_candidates(Lq, _SUBLANE)
    hb_cands = [d for d in range(min(BH, 16), 0, -1) if BH % d == 0]
    fitting, fallback = [], []
    for HB in hb_cands:
        for TQ in tq_cands:
            blocks = 2 * dsize * (HB * TQ * Dk + HB * Dk * Ls + HB * Ls * Dv
                                  + HB * TQ * Dv + HB * TQ * Ls)
            interm = 3 * 4 * HB * TQ * Ls          # fp32 s / p / attn temporaries
            tot = blocks + interm
            steps = (BH // HB) * (Lq // TQ)
            fallback.append((tot, (HB, TQ)))
            if tot <= budget:
                fitting.append(((steps >= 4, HB * TQ), (HB, TQ)))
    if fitting:
        return max(fitting)[1]
    return min(fallback)[1]


def _flash_config(BH, Lq, Dk, Ls, Dv, dsize, budget):
    """(HB, TQ, TK) for the streaming (no-attn-writeback) path."""
    tq_cands = _tile_candidates(Lq, _SUBLANE)
    tk_cands = _tile_candidates(Ls, _LANE)
    hb_cands = [d for d in range(min(BH, 16), 0, -1) if BH % d == 0]
    fitting, fallback = [], []
    for HB in hb_cands:
        for TQ in tq_cands:
            for TK in tk_cands:
                blocks = 2 * dsize * (HB * TQ * Dk + HB * Dk * TK
                                      + HB * TK * Dv + HB * TQ * Dv)
                scratch = (dsize * HB * TQ * Dk                       # pre-scaled q
                           + 4 * HB * TQ * (2 * _LANE + Dv))          # m, l, acc
                interm = 2 * 4 * HB * TQ * TK                         # fp32 s / p
                tot = blocks + scratch + interm
                steps = (BH // HB) * (Lq // TQ) * (Ls // TK)
                fallback.append((tot, (HB, TQ, TK)))
                if tot <= budget:
                    fitting.append(((steps >= 4, HB * TQ * TK), (HB, TQ, TK)))
    if fitting:
        return max(fitting)[1]
    return min(fallback)[1]


def _sdpa_full_kernel(q_ref, k_ref, v_ref, out_ref, attn_ref, *, scale):
    # Blocks: q (HB, TQ, Dk), k (HB, Dk, Ls), v (HB, Ls, Dv).
    q = q_ref[...] * scale                       # scale the small (TQ x Dk) tensor
    s = jnp.einsum("bqd,bdk->bqk", q, k_ref[...],
                   preferred_element_type=jnp.float32)       # (HB, TQ, Ls) fp32
    m = jnp.max(s, axis=-1, keepdims=True)
    p = jnp.exp(s - m)
    inv = pl.reciprocal(jnp.sum(p, axis=-1, keepdims=True), approx=True)   # EUP slot
    # Single cast of the dominant (TQ x Ls) tensor, reused by the PV matmul and
    # the attn writeback (input dtype -> halves attn HBM store traffic for bf16).
    attn = (p * inv).astype(attn_ref.dtype)
    out = jnp.einsum("bqk,bkd->bqd", attn, v_ref[...],
                     preferred_element_type=jnp.float32)
    attn_ref[...] = attn
    out_ref[...] = out.astype(out_ref.dtype)


def _sdpa_flash_kernel(q_ref, k_ref, v_ref, out_ref,
                       qs_sc, m_sc, l_sc, acc_sc, *, scale):
    # grid = (head_blocks, q_blocks, k_blocks); k axis innermost, "arbitrary".
    ki = pl.program_id(2)

    @pl.when(ki == 0)
    def _():
        # The q block is resident across the ki reduction (its index_map is
        # constant in ki): pre-scale once per q tile instead of every k step.
        qs_sc[...] = q_ref[...] * scale
        m_sc[...] = jnp.full_like(m_sc, -jnp.inf)
        l_sc[...] = jnp.zeros_like(l_sc)
        acc_sc[...] = jnp.zeros_like(acc_sc)

    s = jnp.einsum("bqd,bdk->bqk", qs_sc[...], k_ref[...],
                   preferred_element_type=jnp.float32)        # (HB, TQ, TK)

    # m/l scratch is lane-dense (..., 128): full-lane loads/stores each k step.
    m_prev = m_sc[...]
    m_new = jnp.maximum(m_prev, jnp.max(s, axis=-1, keepdims=True))
    alpha = jnp.exp(m_prev - m_new)                            # (HB, TQ, 128)
    p = jnp.exp(s - m_new[..., :1])                            # (HB, TQ, TK)

    l_sc[...] = alpha * l_sc[...] + jnp.sum(p, axis=-1, keepdims=True)
    acc_sc[...] = alpha[..., :1] * acc_sc[...] + jnp.einsum(
        "bqk,bkd->bqd", p.astype(v_ref.dtype), v_ref[...],
        preferred_element_type=jnp.float32)
    m_sc[...] = m_new

    @pl.when(ki == pl.num_programs(2) - 1)
    def _():
        # Normalize the (TQ x Dv) accumulator once (EUP reciprocal).
        inv = pl.reciprocal(l_sc[...][..., :1], approx=True)
        out_ref[...] = (acc_sc[...] * inv).astype(out_ref.dtype)


def scaled_dot_product_attention(q, k, v, *, n_heads=None, return_attn=True):
    """q: [bs, nh, Lq, Dk], k: [bs, nh, Dk, Ls], v: [bs, nh, Ls, Dv].
    return_attn=True  -> (output [bs,nh,Lq,Dv], attn [bs,nh,Lq,Ls])  (module semantics)
    return_attn=False -> output only (flash-style streaming, no attn writeback)."""
    bs, nh, Lq, Dk = q.shape
    Ls = k.shape[-1]
    Dv = v.shape[-1]
    if n_heads is not None:
        assert nh == n_heads
    # Module: scale = (d_model // n_heads) ** -0.5 == head_dim ** -0.5 == Dk ** -0.5.
    scale = float(Dk) ** (-0.5)

    BH = bs * nh
    qf = q.reshape(BH, Lq, Dk)
    kf = k.reshape(BH, Dk, Ls)
    vf = v.reshape(BH, Ls, Dv)

    dsize = jnp.dtype(q.dtype).itemsize
    vmem_limit = _vmem_limit_bytes()
    budget = int(vmem_limit * 0.8)      # headroom for compiler temporaries

    if return_attn:
        HB, TQ = _full_path_config(BH, Lq, Dk, Ls, Dv, dsize, budget)
        kernel = functools.partial(_sdpa_full_kernel, scale=scale)
        out_f, attn_f = pl.pallas_call(
            kernel,
            out_shape=(
                jax.ShapeDtypeStruct((BH, Lq, Dv), q.dtype),
                jax.ShapeDtypeStruct((BH, Lq, Ls), q.dtype),   # input-dtype attn
            ),
            grid_spec=pltpu.PrefetchScalarGridSpec(
                num_scalar_prefetch=0,
                grid=(BH // HB, Lq // TQ),
                in_specs=[
                    pl.BlockSpec((HB, TQ, Dk), lambda h, qi: (h, qi, 0)),
                    pl.BlockSpec((HB, Dk, Ls), lambda h, qi: (h, 0, 0)),
                    pl.BlockSpec((HB, Ls, Dv), lambda h, qi: (h, 0, 0)),
                ],
                out_specs=[
                    pl.BlockSpec((HB, TQ, Dv), lambda h, qi: (h, qi, 0)),
                    pl.BlockSpec((HB, TQ, Ls), lambda h, qi: (h, qi, 0)),
                ],
            ),
            compiler_params=pltpu.CompilerParams(
                dimension_semantics=("parallel", "parallel"),
                vmem_limit_bytes=vmem_limit),
        )(qf, kf, vf)
        return out_f.reshape(bs, nh, Lq, Dv), attn_f.reshape(bs, nh, Lq, Ls)

    # Flash-style streaming path (attn never materialized in HBM).
    HB, TQ, TK = _flash_config(BH, Lq, Dk, Ls, Dv, dsize, budget)
    kernel = functools.partial(_sdpa_flash_kernel, scale=scale)
    # Note: pl.Buffered(3) on the k/v specs can help for very small head_dim if
    # the VMEM budget allows; kept at default depth 2 here.
    out_f = pl.pallas_call(
        kernel,
        out_shape=jax.ShapeDtypeStruct((BH, Lq, Dv), q.dtype),
        grid_spec=pltpu.PrefetchScalarGridSpec(
            num_scalar_prefetch=0,
            grid=(BH // HB, Lq // TQ, Ls // TK),
            in_specs=[
                pl.BlockSpec((HB, TQ, Dk), lambda h, qi, ki: (h, qi, 0)),
                pl.BlockSpec((HB, Dk, TK), lambda h, qi, ki: (h, 0, ki)),
                pl.BlockSpec((HB, TK, Dv), lambda h, qi, ki: (h, ki, 0)),
            ],
            out_specs=pl.BlockSpec((HB, TQ, Dv), lambda h, qi, ki: (h, qi, 0)),
            scratch_shapes=[
                pltpu.VMEM((HB, TQ, Dk), q.dtype),          # pre-scaled q tile
                pltpu.VMEM((HB, TQ, _LANE), jnp.float32),   # running max (lane-dense)
                pltpu.VMEM((HB, TQ, _LANE), jnp.float32),   # running denom (lane-dense)
                pltpu.VMEM((HB, TQ, Dv), jnp.float32),      # output accumulator
            ],
        ),
        compiler_params=pltpu.CompilerParams(
            dimension_semantics=("parallel", "parallel", "arbitrary"),
            vmem_limit_bytes=vmem_limit),
    )(qf, kf, vf)
    return out_f.reshape(bs, nh, Lq, Dv)


def _reference(q, k, v):
    scale = float(q.shape[-1]) ** (-0.5)
    scores = jnp.einsum("bhqd,bhds->bhqs", q, k) * scale
    attn = jax.nn.softmax(scores, axis=-1)
    out = jnp.einsum("bhqs,bhsd->bhqd", attn, v)
    return out, attn


if __name__ == "__main__":
    # Small config implied by the module: d_model=32, n_heads=4 -> d_k = d_v = 8.
    bs, n_heads, q_len, seq_len = 2, 4, 8, 8
    d_model = 32
    head_dim = d_model // n_heads

    key = jax.random.PRNGKey(0)
    kq, kk, kv = jax.random.split(key, 3)
    q = jax.random.normal(kq, (bs, n_heads, q_len, head_dim), dtype=jnp.float32)
    k = jax.random.normal(kk, (bs, n_heads, head_dim, seq_len), dtype=jnp.float32)
    v = jax.random.normal(kv, (bs, n_heads, seq_len, head_dim), dtype=jnp.float32)

    out, attn = scaled_dot_product_attention(q, k, v, n_heads=n_heads, return_attn=True)
    out_fast = scaled_dot_product_attention(q, k, v, n_heads=n_heads, return_attn=False)
    jax.block_until_ready((out, attn, out_fast))

    ref_out, ref_attn = _reference(q, k, v)
    assert jnp.allclose(out, ref_out, atol=2e-3, rtol=2e-3)
    assert jnp.allclose(attn, ref_attn, atol=2e-3, rtol=2e-3)
    assert jnp.allclose(out_fast, ref_out, atol=2e-3, rtol=2e-3)

    # A lane-dense config exercising multi-tile grids on both paths.
    bs2, nh2, L2, hd2 = 1, 2, 256, 64
    kq2, kk2, kv2 = jax.random.split(jax.random.PRNGKey(0), 3)
    q2 = jax.random.normal(kq2, (bs2, nh2, L2, hd2), dtype=jnp.float32)
    k2 = jax.random.normal(kk2, (bs2, nh2, hd2, L2), dtype=jnp.float32)
    v2 = jax.random.normal(kv2, (bs2, nh2, L2, hd2), dtype=jnp.float32)

    out2, attn2 = scaled_dot_product_attention(q2, k2, v2, n_heads=nh2, return_attn=True)
    out2_fast = scaled_dot_product_attention(q2, k2, v2, n_heads=nh2, return_attn=False)
    jax.block_until_ready((out2, attn2, out2_fast))

    ref_out2, ref_attn2 = _reference(q2, k2, v2)
    assert jnp.allclose(out2, ref_out2, atol=2e-3, rtol=2e-3)
    assert jnp.allclose(attn2, ref_attn2, atol=2e-3, rtol=2e-3)
    assert jnp.allclose(out2_fast, ref_out2, atol=2e-3, rtol=2e-3)

    print("KERNEL_OK")
</pallas_src>

<mosaic_0001>
module attributes {stable_mosaic.version = 11 : i64} {
  func.func @_sdpa_full_kernel(%arg0: i32, %arg1: i32, %arg2: memref<2x8x8xf32, #tpu.memory_space<vmem>>, %arg3: memref<2x8x8xf32, #tpu.memory_space<vmem>>, %arg4: memref<2x8x8xf32, #tpu.memory_space<vmem>>, %arg5: memref<2x8x8xf32, #tpu.memory_space<vmem>>, %arg6: memref<2x8x8xf32, #tpu.memory_space<vmem>>) attributes {dimension_semantics = [#tpu.dimension_semantics<parallel>, #tpu.dimension_semantics<parallel>], iteration_bounds = array<i64: 4, 1>, scalar_prefetch = 0 : i64, scratch_operands = 0 : i64, tpu.core_type = #tpu.core_type<tc>, window_params = [{transform_indices = @transform_0, window_bounds = array<i64: 2, 8, 8>}, {transform_indices = @transform_1, window_bounds = array<i64: 2, 8, 8>}, {transform_indices = @transform_2, window_bounds = array<i64: 2, 8, 8>}, {transform_indices = @transform_3, window_bounds = array<i64: 2, 8, 8>}, {transform_indices = @transform_4, window_bounds = array<i64: 2, 8, 8>}]} {
    %c0 = arith.constant 0 : index
    %c0_0 = arith.constant 0 : index
    %c0_1 = arith.constant 0 : index
    %0 = vector.load %arg2[%c0, %c0_0, %c0_1] : memref<2x8x8xf32, #tpu.memory_space<vmem>>, vector<2x8x8xf32>
    %cst = arith.constant 0.353553385 : f32
    %1 = vector.broadcast %cst : f32 to vector<2x8x8xf32>
    %2 = arith.mulf %0, %1 : vector<2x8x8xf32>
    %c0_2 = arith.constant 0 : index
    %c0_3 = arith.constant 0 : index
    %c0_4 = arith.constant 0 : index
    %3 = vector.load %arg3[%c0_2, %c0_3, %c0_4] : memref<2x8x8xf32, #tpu.memory_space<vmem>>, vector<2x8x8xf32>
    "tpu.trace_start"() <{level = 10 : i32, message = "bqd,bdk->bqk"}> : () -> ()
    %cst_5 = arith.constant dense<0.000000e+00> : vector<2x8x8xf32>
    %4 = tpu.matmul %2, %3, %cst_5 {dimension_numbers = #tpu.dot_dimension_numbers<[2], [1], [1], [2], [0, 0, 0, 1, 1, 2], [0], [0]>} : vector<2x8x8xf32>, vector<2x8x8xf32>, vector<2x8x8xf32> -> vector<2x8x8xf32>
    "tpu.trace_stop"() : () -> ()
    %cst_6 = arith.constant dense<0xFF800000> : vector<2x8xf32>
    %5 = vector.multi_reduction <maximumf>, %4, %cst_6 [2] : vector<2x8x8xf32> to vector<2x8xf32>
    %6 = vector.shape_cast %5 : vector<2x8xf32> to vector<2x8x1xf32>
    %7 = vector.broadcast %6 : vector<2x8x1xf32> to vector<2x8x8xf32>
    %8 = arith.subf %4, %7 : vector<2x8x8xf32>
    %9 = math.exp %8 : vector<2x8x8xf32>
    %cst_7 = arith.constant dense<0.000000e+00> : vector<2x8xf32>
    %10 = vector.multi_reduction <add>, %9, %cst_7 [2] : vector<2x8x8xf32> to vector<2x8xf32>
    %11 = vector.shape_cast %10 : vector<2x8xf32> to vector<2x8x1xf32>
    %12 = tpu.reciprocal %11 {approx = true} : vector<2x8x1xf32> -> vector<2x8x1xf32>
    %13 = vector.broadcast %12 : vector<2x8x1xf32> to vector<2x8x8xf32>
    %14 = arith.mulf %9, %13 : vector<2x8x8xf32>
    %c0_8 = arith.constant 0 : index
    %c0_9 = arith.constant 0 : index
    %c0_10 = arith.constant 0 : index
    %15 = vector.load %arg4[%c0_8, %c0_9, %c0_10] : memref<2x8x8xf32, #tpu.memory_space<vmem>>, vector<2x8x8xf32>
    "tpu.trace_start"() <{level = 10 : i32, message = "bqk,bkd->bqd"}> : () -> ()
    %cst_11 = arith.constant dense<0.000000e+00> : vector<2x8x8xf32>
    %16 = tpu.matmul %14, %15, %cst_11 {dimension_numbers = #tpu.dot_dimension_numbers<[2], [1], [1], [2], [0, 0, 0, 1, 1, 2], [0], [0]>} : vector<2x8x8xf32>, vector<2x8x8xf32>, vector<2x8x8xf32> -> vector<2x8x8xf32>
    "tpu.trace_stop"() : () -> ()
    %c0_12 = arith.constant 0 : index
    %c0_13 = arith.constant 0 : index
    %c0_14 = arith.constant 0 : index
    %17 = vector.load %arg6[%c0_12, %c0_13, %c0_14] : memref<2x8x8xf32, #tpu.memory_space<vmem>>, vector<2x8x8xf32>
    tpu.vector_store %arg6[%c0_12, %c0_13, %c0_14], %14 {strides = array<i32>} : memref<2x8x8xf32, #tpu.memory_space<vmem>>, vector<2x8x8xf32>,
    %c0_15 = arith.constant 0 : index
    %c0_16 = arith.constant 0 : index
    %c0_17 = arith.constant 0 : index
    %18 = vector.load %arg5[%c0_15, %c0_16, %c0_17] : memref<2x8x8xf32, #tpu.memory_space<vmem>>, vector<2x8x8xf32>
    tpu.vector_store %arg5[%c0_15, %c0_16, %c0_17], %16 {strides = array<i32>} : memref<2x8x8xf32, #tpu.memory_space<vmem>>, vector<2x8x8xf32>,
    return
  }
  func.func @transform_0(%arg0: i32, %arg1: i32) -> (i32, i32, i32) {
    %c0_i32 = arith.constant 0 : i32
    %c0_i32_0 = arith.constant 0 : i32
    return %arg0, %arg1, %c0_i32 : i32, i32, i32
  }
  func.func @transform_1(%arg0: i32, %arg1: i32) -> (i32, i32, i32) {
    %c0_i32 = arith.constant 0 : i32
    %c0_i32_0 = arith.constant 0 : i32
    %c0_i32_1 = arith.constant 0 : i32
    return %arg0, %c0_i32, %c0_i32_0 : i32, i32, i32
  }
  func.func @transform_2(%arg0: i32, %arg1: i32) -> (i32, i32, i32) {
    %c0_i32 = arith.constant 0 : i32
    %c0_i32_0 = arith.constant 0 : i32
    %c0_i32_1 = arith.constant 0 : i32
    return %arg0, %c0_i32, %c0_i32_0 : i32, i32, i32
  }
  func.func @transform_3(%arg0: i32, %arg1: i32) -> (i32, i32, i32) {
    %c0_i32 = arith.constant 0 : i32
    %c0_i32_0 = arith.constant 0 : i32
    return %arg0, %arg1, %c0_i32 : i32, i32, i32
  }
  func.func @transform_4(%arg0: i32, %arg1: i32) -> (i32, i32, i32) {
    %c0_i32 = arith.constant 0 : i32
    %c0_i32_0 = arith.constant 0 : i32
    return %arg0, %arg1, %c0_i32 : i32, i32, i32
  }
}

</mosaic_0001>

<llo_original>
// kernel: tpu_custom_call.1
$region0: #{tpu_custom_call.1}
  #allocation0 [shape = 'u32[]', space=smem, size = 0x4, offset = 0x4, fixed_abs, tag = 'smem constant byte address 0x4 - core index']
  #allocation1 [shape = 'u32[144,128]{1,0:T(1,128)}', space=vmem, size = 0x12000, scoped, tag = 'internal scratch']
  %s0 = inlined_call_operand.hbm [shape: f32[8,8,8], index: 0, kind: input, shape index: {}]
  %s1 = inlined_call_operand.hbm [shape: f32[8,8,8], index: 1, kind: input, shape index: {}]
  %s2 = inlined_call_operand.hbm [shape: f32[8,8,8], index: 2, kind: input, shape index: {}]
  %s3 = inlined_call_operand.hbm [shape: f32[8,8,8], index: 3, kind: output, shape index: {0}]
  %s4 = inlined_call_operand.hbm [shape: f32[8,8,8], index: 4, kind: output, shape index: {1}]
  %5 = xla_tuple %s3, %s4
  %s6 = sld [smem:[#allocation0]]
  $region65: #{tpu_custom_call.1} parent=0
    _
  %s8 = ssub.s32 1, %s6
  %s9 = scalar_select 0, %s8, %s6
  $region1: #{tpu_custom_call.1} parent=0
    #allocation2 [shape = 'u8[16384]{0}', space=vmem, size = 0x4000, scoped, tag = 'input window, operand 0']
    #allocation3 [shape = 's32[2]{0}', space=sflag, size = 0x8, scoped, tag = 'scoped memory for tpu_custom_call.1']
    #allocation4 [shape = 's32[2]{0}', space=sflag, size = 0x8, scoped, tag = 'scoped memory for tpu_custom_call.1']
    #allocation5 [shape = 'u8[16384]{0}', space=vmem, size = 0x4000, scoped, tag = 'input window, operand 1']
    #allocation6 [shape = 's32[2]{0}', space=sflag, size = 0x8, scoped, tag = 'scoped memory for tpu_custom_call.1']
    #allocation7 [shape = 'u8[16384]{0}', space=vmem, size = 0x4000, scoped, tag = 'input window, operand 2']
    #allocation8 [shape = 'u8[16384]{0}', space=vmem, size = 0x4000, scoped, tag = 'output window, operand 0']
    #allocation9 [shape = 'u8[16384]{0}', space=vmem, size = 0x4000, scoped, tag = 'output window, operand 1']
    #allocation10 [shape = 's32[2]{0}', space=sflag, size = 0x8, scoped, tag = 'scoped memory for tpu_custom_call.1']
    %10 = vsyncpa [#allocation3], 0
    %s11 = scalar_lea.sflag [#allocation3], 1
    %12 = vsyncpa %s11, 0
    %13 = vsyncpa [#allocation6], 0
    %s14 = scalar_lea.sflag [#allocation6], 1
    %15 = vsyncpa %s14, 0
    %16 = vsyncpa [#allocation4], 0
    %s17 = scalar_lea.sflag [#allocation4], 1
    %18 = vsyncpa %s17, 0
    %19 = vsyncpa [#allocation10], 0
    %s20 = scalar_lea.sflag [#allocation10], 1
    %21 = vsyncpa %s20, 0
    loop: start=0, step=1, limit=6
    $region2: #{tpu_custom_call.1} parent=1 // loop_pre_header
      _
    $region3: #{tpu_custom_call.1} parent=1 // loop_header
      %s23 = sphi 0, %s27
      %p24 = scmp.ge.s32.totalorder %s23, 6
      %s30 = sphi 0, %s42
      %s31 = sphi 0, %s38
      %s32 = sphi 0, %s30
      %s33 = sphi 0, %s31
      %s34 = sphi 0, %s32
      %s35 = sphi 0, %s33
      %s47 = sphi 0, %s49
      %s50 = sphi 0, %s47
      %s51 = sphi 0, %s50
      %s67 = sphi 0, %s51
      %s73 = sphi 0, %s75
      %s76 = sphi 0, %s73
      %s77 = sphi 0, %s76
      %s93 = sphi 0, %s77
      %s99 = sphi 0, %s101
      %s102 = sphi 0, %s99
      %s103 = sphi 0, %s102
      %s119 = sphi 0, %s103
      %s127 = sphi 0, %s129
      %s130 = sphi 0, %s127
      %s131 = sphi 0, %s130
      %s147 = sphi 0, %s131
      %s155 = sphi 0, %s157
      %s158 = sphi 0, %s155
      %s159 = sphi 0, %s158
      %s175 = sphi 0, %s159
    $region4: #{tpu_custom_call.1} parent=1 // loop_header_branch
      %26 = sbr.rel (%p24) target = $region8
    $region5: #{tpu_custom_call.1} parent=1 // loop_body
      %s28 = ssub.s32 %s23, 1
      %s29 = ssub.s32 %s23, 2
      %s36 = sadd.s32 1, %s31
      %p37 = scmp.ge.s32.totalorder %s36, 1
      %s38 = scalar_select %p37, 0, %s36
      %s39 = sadd.s32 1, %s30
      %s40 = scalar_select %p37, %s39, %s30
      %p41 = scmp.ge.s32.totalorder %s40, 4
      %s42 = scalar_select %p41, 0, %s40
      %s43 = ssub.s32 %s30, %s42
      %s44 = ssub.s32 %s31, %s38
      %s45 = sor.u32 %s43, %s44
      %p46 = scmp.eq.s32.totalorder %s45, 0
      %s48 = sadd.s32 %s47, 1
      %s49 = scalar_select %p46, %s47, %s48
      %p52 = pneg %p46
      %p53 = scmp.eq.s32.totalorder %s23, 3
      %p54 = por %p52, %p53
      %p55 = scmp.ne.s32.totalorder %s47, %s50
      %p56 = scmp.eq.s32.totalorder %s23, 0
      %p57 = por %p55, %p56
      %p58 = scmp.ne.s32.totalorder %s47, %s50
      %p59 = scmp.eq.s32.totalorder %s28, 3
      %p60 = por %p58, %p59
      %p61 = scmp.ne.s32.totalorder %s50, %s51
      %p62 = scmp.eq.s32.totalorder %s28, 0
      %p63 = por %p61, %p62
      %p64 = scmp.ne.s32.totalorder %s50, %s51
      %p65 = scmp.eq.s32.totalorder %s29, 3
      %p66 = por %p64, %p65
      %p68 = scmp.ne.s32.totalorder %s51, %s67
      %p69 = scmp.eq.s32.totalorder %s29, 0
      %p70 = por %p68, %p69
      %s71 = ssub.s32 %s30, %s42
      %p72 = scmp.eq.s32.totalorder %s71, 0
      %s74 = sadd.s32 %s73, 1
      %s75 = scalar_select %p72, %s73, %s74
      %p78 = pneg %p72
      %p79 = scmp.eq.s32.totalorder %s23, 3
      %p80 = por %p78, %p79
      %p81 = scmp.ne.s32.totalorder %s73, %s76
      %p82 = scmp.eq.s32.totalorder %s23, 0
      %p83 = por %p81, %p82
      %p84 = scmp.ne.s32.totalorder %s73, %s76
      %p85 = scmp.eq.s32.totalorder %s28, 3
      %p86 = por %p84, %p85
      %p87 = scmp.ne.s32.totalorder %s76, %s77
      %p88 = scmp.eq.s32.totalorder %s28, 0
      %p89 = por %p87, %p88
      %p90 = scmp.ne.s32.totalorder %s76, %s77
      %p91 = scmp.eq.s32.totalorder %s29, 3
      %p92 = por %p90, %p91
      %p94 = scmp.ne.s32.totalorder %s77, %s93
      %p95 = scmp.eq.s32.totalorder %s29, 0
      %p96 = por %p94, %p95
      %s97 = ssub.s32 %s30, %s42
      %p98 = scmp.eq.s32.totalorder %s97, 0
      %s100 = sadd.s32 %s99, 1
      %s101 = scalar_select %p98, %s99, %s100
      %p104 = pneg %p98
      %p105 = scmp.eq.s32.totalorder %s23, 3
      %p106 = por %p104, %p105
      %p107 = scmp.ne.s32.totalorder %s99, %s102
      %p108 = scmp.eq.s32.totalorder %s23, 0
      %p109 = por %p107, %p108
      %p110 = scmp.ne.s32.totalorder %s99, %s102
      %p111 = scmp.eq.s32.totalorder %s28, 3
      %p112 = por %p110, %p111
      %p113 = scmp.ne.s32.totalorder %s102, %s103
      %p114 = scmp.eq.s32.totalorder %s28, 0
      %p115 = por %p113, %p114
      %p116 = scmp.ne.s32.totalorder %s102, %s103
      %p117 = scmp.eq.s32.totalorder %s29, 3
      %p118 = por %p116, %p117
      %p120 = scmp.ne.s32.totalorder %s103, %s119
      %p121 = scmp.eq.s32.totalorder %s29, 0
      %p122 = por %p120, %p121
      %s123 = ssub.s32 %s30, %s42
      %s124 = ssub.s32 %s31, %s38
      %s125 = sor.u32 %s123, %s124
      %p126 = scmp.eq.s32.totalorder %s125, 0
      %s128 = sadd.s32 %s127, 1
      %s129 = scalar_select %p126, %s127, %s128
      %p132 = pneg %p126
      %p133 = scmp.eq.s32.totalorder %s23, 3
      %p134 = por %p132, %p133
      %p135 = scmp.ne.s32.totalorder %s127, %s130
      %p136 = scmp.eq.s32.totalorder %s23, 0
      %p137 = por %p135, %p136
      %p138 = scmp.ne.s32.totalorder %s127, %s130
      %p139 = scmp.eq.s32.totalorder %s28, 3
      %p140 = por %p138, %p139
      %p141 = scmp.ne.s32.totalorder %s130, %s131
      %p142 = scmp.eq.s32.totalorder %s28, 0
      %p143 = por %p141, %p142
      %p144 = scmp.ne.s32.totalorder %s130, %s131
      %p145 = scmp.eq.s32.totalorder %s29, 3
      %p146 = por %p144, %p145
      %p148 = scmp.ne.s32.totalorder %s131, %s147
      %p149 = scmp.eq.s32.totalorder %s29, 0
      %p150 = por %p148, %p149
      %s151 = ssub.s32 %s30, %s42
      %s152 = ssub.s32 %s31, %s38
      %s153 = sor.u32 %s151, %s152
      %p154 = scmp.eq.s32.totalorder %s153, 0
      %s156 = sadd.s32 %s155, 1
      %s157 = scalar_select %p154, %s155, %s156
      %p160 = pneg %p154
      %p161 = scmp.eq.s32.totalorder %s23, 3
      %p162 = por %p160, %p161
      %p163 = scmp.ne.s32.totalorder %s155, %s158
      %p164 = scmp.eq.s32.totalorder %s23, 0
      %p165 = por %p163, %p164
      %p166 = scmp.ne.s32.totalorder %s155, %s158
      %p167 = scmp.eq.s32.totalorder %s28, 3
      %p168 = por %p166, %p167
      %p169 = scmp.ne.s32.totalorder %s158, %s159
      %p170 = scmp.eq.s32.totalorder %s28, 0
      %p171 = por %p169, %p170
      %p172 = scmp.ne.s32.totalorder %s158, %s159
      %p173 = scmp.eq.s32.totalorder %s29, 3
      %p174 = por %p172, %p173
      %p176 = scmp.ne.s32.totalorder %s159, %s175
      %p177 = scmp.eq.s32.totalorder %s29, 0
      %p178 = por %p176, %p177
      %p179 = scmp.le.s32.totalorder 1, %s23
      %p180 = scmp.lt.s32.totalorder %s23, 5
      %p181 = pnand %p179, %p180
      %p182 = pneg %p181
      // Predicated region
      $region9: #{tpu_custom_call.1} parent=5 // pred_check
        _
      $region10: #{tpu_custom_call.1} parent=5 // pred_check_branch
        %184 = sbr.rel (%p181) target = $region12
      $region11: #{tpu_custom_call.1} parent=5 // pred_region
        %s185 = ssub.s32 %s23, 1
      $region12: #{tpu_custom_call.1} parent=5 // pred_fallthru
        _
      %p186 = scmp.lt.s32.totalorder %s23, 4
      // Predicated region
      $region13: #{tpu_custom_call.1} parent=5 // pred_check
        %p187 = pneg %p186
      $region14: #{tpu_custom_call.1} parent=5 // pred_check_branch
        %189 = sbr.rel (%p187) target = $region16
      $region15: #{tpu_custom_call.1} parent=5 // pred_region
        // Predicated region
        $region17: #{tpu_custom_call.1} parent=15 // pred_check
          %p190 = pneg %p57
        $region18: #{tpu_custom_call.1} parent=15 // pred_check_branch
          %192 = sbr.rel (%p190) target = $region20
        $region19: #{tpu_custom_call.1} parent=15 // pred_region
          %s193 = sand.u32 %s47, 1
          %s194 = scalar_lea.sflag [#allocation3], %s193
          %s195 = sand.u32 %s47, 1
          %s196 = smul.addr %s195, 16
          %s197 = scalar_lea.vmem [#allocation2], %s196
          %s198 = smul.u32 2, %s30
          %s200 = ssub.s32 256, 256
          %201 = vsyncadd %s194, %s200
          %s202 = sadd.s32 %s31, %s198
          %s203 = smul.addr %s202, 128
          %s204 = scalar_lea.hbm %s0, %s203
          %s205 = sshll.u32 %s197, 4
          %s206 = int_to_ptr.vmem [resolvable:$true] %s205
          %211 = dma.hbm_to_vmem [thread:$0]  %s204, 256, %s206, %s194, 128, 128, 8
        $region20: #{tpu_custom_call.1} parent=15 // pred_fallthru
          _
        // Predicated region
        $region21: #{tpu_custom_call.1} parent=15 // pred_check
          %p212 = pneg %p83
        $region22: #{tpu_custom_call.1} parent=15 // pred_check_branch
          %214 = sbr.rel (%p212) target = $region24
        $region23: #{tpu_custom_call.1} parent=15 // pred_region
          %s215 = sand.u32 %s23, 1
          %s216 = scalar_lea.sflag [#allocation6], %s215
          %s217 = sand.u32 %s73, 1
          %s218 = smul.addr %s217, 16
          %s219 = scalar_lea.vmem [#allocation5], %s218
          %s220 = smul.u32 2, %s30
          %s222 = ssub.s32 256, 256
          %223 = vsyncadd %s216, %s222
          %s224 = smul.addr %s220, 128
          %s225 = scalar_lea.hbm %s1, %s224
          %s226 = sshll.u32 %s219, 4
          %s227 = int_to_ptr.vmem [resolvable:$true] %s226
          %232 = dma.hbm_to_vmem [thread:$0]  %s225, 256, %s227, %s216, 128, 128, 8
        $region24: #{tpu_custom_call.1} parent=15 // pred_fallthru
          _
        // Predicated region
        $region25: #{tpu_custom_call.1} parent=15 // pred_check
          %p233 = pneg %p109
        $region26: #{tpu_custom_call.1} parent=15 // pred_check_branch
          %235 = sbr.rel (%p233) target = $region28
        $region27: #{tpu_custom_call.1} parent=15 // pred_region
          %s236 = sand.u32 %s23, 1
          %s237 = scalar_lea.sflag [#allocation6], %s236
          %s238 = sand.u32 %s99, 1
          %s239 = smul.addr %s238, 16
          %s240 = scalar_lea.vmem [#allocation7], %s239
          %s241 = smul.u32 2, %s30
          %s243 = ssub.s32 256, 256
          %244 = vsyncadd %s237, %s243
          %s245 = smul.addr %s241, 128
          %s246 = scalar_lea.hbm %s2, %s245
          %s247 = sshll.u32 %s240, 4
          %s248 = int_to_ptr.vmem [resolvable:$true] %s247
          %253 = dma.hbm_to_vmem [thread:$0]  %s246, 256, %s248, %s237, 128, 128, 8
        $region28: #{tpu_custom_call.1} parent=15 // pred_fallthru
          _
      $region16: #{tpu_custom_call.1} parent=5 // pred_fallthru
        _
      %p254 = scmp.le.s32.totalorder 1, %s23
      %p255 = scmp.lt.s32.totalorder %s23, 5
      %p256 = pnand %p254, %p255
      %p257 = pneg %p256
      // Predicated region
      $region29: #{tpu_custom_call.1} parent=5 // pred_check
        _
      $region30: #{tpu_custom_call.1} parent=5 // pred_check_branch
        %259 = sbr.rel (%p256) target = $region32
      $region31: #{tpu_custom_call.1} parent=5 // pred_region
        %s260 = ssub.s32 %s23, 1
        %s261 = sand.u32 %s50, 1
        %s262 = scalar_lea.sflag [#allocation3], %s261
        %s263 = sand.u32 %s50, 1
        %s264 = smul.addr %s263, 16
        %s265 = scalar_lea.vmem [#allocation2], %s264
        // Predicated region
        $region33: #{tpu_custom_call.1} parent=31 // pred_check
          %p266 = pneg %p63
        $region34: #{tpu_custom_call.1} parent=31 // pred_check_branch
          %268 = sbr.rel (%p266) target = $region36
        $region35: #{tpu_custom_call.1} parent=31 // pred_region
          %269 = dma.done %s262, 256
        $region36: #{tpu_custom_call.1} parent=31 // pred_fallthru
          _
        %s270 = sand.u32 %s28, 1
        %s271 = scalar_lea.sflag [#allocation6], %s270
        %s272 = sand.u32 %s76, 1
        %s273 = smul.addr %s272, 16
        %s274 = scalar_lea.vmem [#allocation5], %s273
        // Predicated region
        $region37: #{tpu_custom_call.1} parent=31 // pred_check
          %p275 = pneg %p89
        $region38: #{tpu_custom_call.1} parent=31 // pred_check_branch
          %277 = sbr.rel (%p275) target = $region40
        $region39: #{tpu_custom_call.1} parent=31 // pred_region
          %278 = dma.done %s271, 256
        $region40: #{tpu_custom_call.1} parent=31 // pred_fallthru
          _
        %s279 = sand.u32 %s28, 1
        %s280 = scalar_lea.sflag [#allocation6], %s279
        %s281 = sand.u32 %s102, 1
        %s282 = smul.addr %s281, 16
        %s283 = scalar_lea.vmem [#allocation7], %s282
        // Predicated region
        $region41: #{tpu_custom_call.1} parent=31 // pred_check
          %p284 = pneg %p115
        $region42: #{tpu_custom_call.1} parent=31 // pred_check_branch
          %286 = sbr.rel (%p284) target = $region44
        $region43: #{tpu_custom_call.1} parent=31 // pred_region
          %287 = dma.done %s280, 256
        $region44: #{tpu_custom_call.1} parent=31 // pred_fallthru
          _
        %s288 = sand.u32 %s50, 1
        %s289 = scalar_lea.sflag [#allocation3], %s288
        %s290 = sand.u32 %s50, 1
        %s291 = smul.addr %s290, 16
        %s292 = scalar_lea.vmem [#allocation2], %s291
        %p293 = pneg %p63
        %p294 = pneg %p60
        %s295 = sand.u32 %s28, 1
        %s296 = scalar_lea.sflag [#allocation6], %s295
        %s297 = sand.u32 %s76, 1
        %s298 = smul.addr %s297, 16
        %s299 = scalar_lea.vmem [#allocation5], %s298
        %p300 = pneg %p89
        %p301 = pneg %p86
        %s302 = sand.u32 %s28, 1
        %s303 = scalar_lea.sflag [#allocation6], %s302
        %s304 = sand.u32 %s102, 1
        %s305 = smul.addr %s304, 16
        %s306 = scalar_lea.vmem [#allocation7], %s305
        %p307 = pneg %p115
        %p308 = pneg %p112
        %p309 = pneg %p143
        %p310 = pneg %p140
        %s311 = sand.u32 %s130, 1
        %s312 = scalar_lea.sflag [#allocation4], %s311
        %s313 = sand.u32 %s130, 1
        %s314 = smul.addr %s313, 16
        %s315 = scalar_lea.vmem [#allocation8], %s314
        %p316 = pneg %p171
        %p317 = pneg %p168
        %s318 = sand.u32 %s158, 1
        %s319 = scalar_lea.sflag [#allocation10], %s318
        %s320 = sand.u32 %s158, 1
        %s321 = smul.addr %s320, 16
        %s322 = scalar_lea.vmem [#allocation9], %s321
        %s323 = smul.u32 2, %s32
        %s324 = smul.u32 2, %s32
        %s325 = smul.u32 2, %s32
        %s326 = smul.u32 2, %s32
        %s327 = smul.u32 2, %s32
        %v328 = vld [vmem:[%s265] sm:$0xff]
        %v329 = vld [vmem:[%s265 + $0x8] sm:$0xff]
        %v330 = vmul.f32 %v328, 0.35355338
        %v331 = vmul.f32 %v329, 0.35355338
        %v332 = vld [vmem:[%s274] sm:$0xff]
        %v333 = vld [vmem:[%s274 + $0x8] sm:$0xff]
        %vm334 = vcmask 64512
        %v336 = vsel %vm334, %v330, 0
        %338 = vmatprep.subr.mxu0 0.0
        %339 = vmatpush1.msra.mxu0 %v332
        %340 = vmatprep.subr.mxu0 0.0
        %341 = vmatpush1.msra.mxu0 0.0
        %342 = vmatprep.subr.mxu0 0.0
        %343 = vmatpush1.msra.mxu0 0.0
        %344 = vmatprep.subr.mxu0 0.0
        %345 = vmatpush1.msra.mxu0 0.0
        %346 = vmatprep.subr.mxu0 0.0
        %347 = vmatpush1.msra.mxu0 0.0
        %348 = vmatprep.subr.mxu0 0.0
        %349 = vmatpush1.msra.mxu0 0.0
        %350 = vmatprep.subr.mxu0 0.0
        %351 = vmatpush1.msra.mxu0 0.0
        %352 = vmatprep.subr.mxu0 0.0
        %353 = vmatpush1.msra.mxu0 0.0
        %354 = vmatprep.subr.mxu0 0.0
        %355 = vmatpush1.msra.mxu0 0.0
        %356 = vmatprep.subr.mxu0 0.0
        %357 = vmatpush1.msra.mxu0 0.0
        %358 = vmatprep.subr.mxu0 0.0
        %359 = vmatpush1.msra.mxu0 0.0
        %360 = vmatprep.subr.mxu0 0.0
        %361 = vmatpush1.msra.mxu0 0.0
        %362 = vmatprep.subr.mxu0 0.0
        %363 = vmatpush1.msra.mxu0 0.0
        %364 = vmatprep.subr.mxu0 0.0
        %365 = vmatpush1.msra.mxu0 0.0
        %366 = vmatprep.subr.mxu0 0.0
        %367 = vmatpush1.msra.mxu0 0.0
        %368 = vmatprep.subr.mxu0 0.0
        %369 = vmatpush1.msra.mxu0 0.0
        %370 = vmatprep.subr.mxu0 0.0
        %371 = vmatpush1.msra.mxu0 0.0
        %372 = vmatprep.subr.mxu0 0.0
        %373 = vmatpush1.msra.mxu0 0.0
        %374 = vmatprep.subr.mxu0 0.0
        %375 = vmatpush1.msra.mxu0 0.0
        %376 = vmatprep.subr.mxu0 0.0
        %377 = vmatpush1.msra.mxu0 0.0
        %378 = vmatprep.subr.mxu0 0.0
        %379 = vmatpush1.msra.mxu0 0.0
        %380 = vmatprep.subr.mxu0 0.0
        %381 = vmatpush1.msra.mxu0 0.0
        %382 = vmatprep.subr.mxu0 0.0
        %383 = vmatpush1.msra.mxu0 0.0
        %384 = vmatprep.subr.mxu0 0.0
        %385 = vmatpush1.msra.mxu0 0.0
        %386 = vmatprep.subr.mxu0 0.0
        %387 = vmatpush1.msra.mxu0 0.0
        %388 = vmatprep.subr.mxu0 0.0
        %389 = vmatpush1.msra.mxu0 0.0
        %390 = vmatprep.subr.mxu0 0.0
        %391 = vmatpush1.msra.mxu0 0.0
        %392 = vmatprep.subr.mxu0 0.0
        %393 = vmatpush1.msra.mxu0 0.0
        %394 = vmatprep.subr.mxu0 0.0
        %395 = vmatpush1.msra.mxu0 0.0
        %396 = vmatprep.subr.mxu0 0.0
        %397 = vmatpush1.msra.mxu0 0.0
        %398 = vmatprep.subr.mxu0 0.0
        %399 = vmatpush1.msra.mxu0 0.0
        %400 = vmatprep.subr.mxu0 0.0
        %401 = vmatpush1.msra.mxu0 0.0
        %402 = vmatprep.mubr.f32.mxu0 0.0
        %403 = vmatmul.mubr.f32.gmra.mrb[0].mxu0 %v336
        %v404 = vpop.f32.mrb[0].mxu0
        %v405 = vadd.f32 0.0, %v404
        %v406 = vpop.f32.mrb[0].mxu0
        %407 = vdwg.mxu0
        %v409 = vsel %vm334, %v331, 0
        %411 = vmatprep.subr.mxu0 0.0
        %412 = vmatpush1.msra.mxu0 %v333
        %413 = vmatprep.subr.mxu0 0.0
        %414 = vmatpush1.msra.mxu0 0.0
        %415 = vmatprep.subr.mxu0 0.0
        %416 = vmatpush1.msra.mxu0 0.0
        %417 = vmatprep.subr.mxu0 0.0
        %418 = vmatpush1.msra.mxu0 0.0
        %419 = vmatprep.subr.mxu0 0.0
        %420 = vmatpush1.msra.mxu0 0.0
        %421 = vmatprep.subr.mxu0 0.0
        %422 = vmatpush1.msra.mxu0 0.0
        %423 = vmatprep.subr.mxu0 0.0
        %424 = vmatpush1.msra.mxu0 0.0
        %425 = vmatprep.subr.mxu0 0.0
        %426 = vmatpush1.msra.mxu0 0.0
        %427 = vmatprep.subr.mxu0 0.0
        %428 = vmatpush1.msra.mxu0 0.0
        %429 = vmatprep.subr.mxu0 0.0
        %430 = vmatpush1.msra.mxu0 0.0
        %431 = vmatprep.subr.mxu0 0.0
        %432 = vmatpush1.msra.mxu0 0.0
        %433 = vmatprep.subr.mxu0 0.0
        %434 = vmatpush1.msra.mxu0 0.0
        %435 = vmatprep.subr.mxu0 0.0
        %436 = vmatpush1.msra.mxu0 0.0
        %437 = vmatprep.subr.mxu0 0.0
        %438 = vmatpush1.msra.mxu0 0.0
        %439 = vmatprep.subr.mxu0 0.0
        %440 = vmatpush1.msra.mxu0 0.0
        %441 = vmatprep.subr.mxu0 0.0
        %442 = vmatpush1.msra.mxu0 0.0
        %443 = vmatprep.subr.mxu0 0.0
        %444 = vmatpush1.msra.mxu0 0.0
        %445 = vmatprep.subr.mxu0 0.0
        %446 = vmatpush1.msra.mxu0 0.0
        %447 = vmatprep.subr.mxu0 0.0
        %448 = vmatpush1.msra.mxu0 0.0
        %449 = vmatprep.subr.mxu0 0.0
        %450 = vmatpush1.msra.mxu0 0.0
        %451 = vmatprep.subr.mxu0 0.0
        %452 = vmatpush1.msra.mxu0 0.0
        %453 = vmatprep.subr.mxu0 0.0
        %454 = vmatpush1.msra.mxu0 0.0
        %455 = vmatprep.subr.mxu0 0.0
        %456 = vmatpush1.msra.mxu0 0.0
        %457 = vmatprep.subr.mxu0 0.0
        %458 = vmatpush1.msra.mxu0 0.0
        %459 = vmatprep.subr.mxu0 0.0
        %460 = vmatpush1.msra.mxu0 0.0
        %461 = vmatprep.subr.mxu0 0.0
        %462 = vmatpush1.msra.mxu0 0.0
        %463 = vmatprep.subr.mxu0 0.0
        %464 = vmatpush1.msra.mxu0 0.0
        %465 = vmatprep.subr.mxu0 0.0
        %466 = vmatpush1.msra.mxu0 0.0
        %467 = vmatprep.subr.mxu0 0.0
        %468 = vmatpush1.msra.mxu0 0.0
        %469 = vmatprep.subr.mxu0 0.0
        %470 = vmatpush1.msra.mxu0 0.0
        %471 = vmatprep.subr.mxu0 0.0
        %472 = vmatpush1.msra.mxu0 0.0
        %473 = vmatprep.subr.mxu0 0.0
        %474 = vmatpush1.msra.mxu0 0.0
        %475 = vmatprep.mubr.f32.mxu0 0.0
        %476 = vmatmul.mubr.f32.gmra.mrb[0].mxu0 %v409
        %v477 = vpop.f32.mrb[0].mxu0
        %v478 = vadd.f32 0.0, %v477
        %v479 = vpop.f32.mrb[0].mxu0
        %480 = vdwg.mxu0
        %v481 = vsel %vm334, %v405, -inf
        %482 = vmax.xlane.f32.xlu0 %v481
        %v483 = vpop.xlane.xlu0 %482
        %v484 = vsel %vm334, %v478, -inf
        %485 = vmax.xlane.f32.xlu0 %v484
        %v486 = vpop.xlane.xlu0 %485
        %v487 = vsub.f32 %v405, %v483
        %v488 = vsub.f32 %v478, %v486
        %v489 = vmul.f32 %v487, 1.442695
        %v490 = vpow.pop %v489
        %v491 = vmul.f32 %v488, 1.442695
        %v492 = vpow.pop %v491
        %v493 = vsel %vm334, %v490, 0.0
        %494 = vadd.xlane.f32.xlu0 %v493
        %v495 = vpop.xlane.xlu0 %494
        %v496 = vsel %vm334, %v492, 0.0
        %497 = vadd.xlane.f32.xlu0 %v496
        %v498 = vpop.xlane.xlu0 %497
        %v499 = vrcp.pop %v495
        %v500 = vrcp.pop %v498
        %v501 = vmul.f32 %v490, %v499
        %v502 = vmul.f32 %v492, %v500
        %v503 = vld [vmem:[%s283] sm:$0xff]
        %v504 = vld [vmem:[%s283 + $0x8] sm:$0xff]
        %v506 = vsel %vm334, %v501, 0
        %508 = vmatprep.subr.mxu0 0.0
        %509 = vmatpush1.msra.mxu0 %v503
        %510 = vmatprep.subr.mxu0 0.0
        %511 = vmatpush1.msra.mxu0 0.0
        %512 = vmatprep.subr.mxu0 0.0
        %513 = vmatpush1.msra.mxu0 0.0
        %514 = vmatprep.subr.mxu0 0.0
        %515 = vmatpush1.msra.mxu0 0.0
        %516 = vmatprep.subr.mxu0 0.0
        %517 = vmatpush1.msra.mxu0 0.0
        %518 = vmatprep.subr.mxu0 0.0
        %519 = vmatpush1.msra.mxu0 0.0
        %520 = vmatprep.subr.mxu0 0.0
        %521 = vmatpush1.msra.mxu0 0.0
        %522 = vmatprep.subr.mxu0 0.0
        %523 = vmatpush1.msra.mxu0 0.0
        %524 = vmatprep.subr.mxu0 0.0
        %525 = vmatpush1.msra.mxu0 0.0
        %526 = vmatprep.subr.mxu0 0.0
        %527 = vmatpush1.msra.mxu0 0.0
        %528 = vmatprep.subr.mxu0 0.0
        %529 = vmatpush1.msra.mxu0 0.0
        %530 = vmatprep.subr.mxu0 0.0
        %531 = vmatpush1.msra.mxu0 0.0
        %532 = vmatprep.subr.mxu0 0.0
        %533 = vmatpush1.msra.mxu0 0.0
        %534 = vmatprep.subr.mxu0 0.0
        %535 = vmatpush1.msra.mxu0 0.0
        %536 = vmatprep.subr.mxu0 0.0
        %537 = vmatpush1.msra.mxu0 0.0
        %538 = vmatprep.subr.mxu0 0.0
        %539 = vmatpush1.msra.mxu0 0.0
        %540 = vmatprep.subr.mxu0 0.0
        %541 = vmatpush1.msra.mxu0 0.0
        %542 = vmatprep.subr.mxu0 0.0
        %543 = vmatpush1.msra.mxu0 0.0
        %544 = vmatprep.subr.mxu0 0.0
        %545 = vmatpush1.msra.mxu0 0.0
        %546 = vmatprep.subr.mxu0 0.0
        %547 = vmatpush1.msra.mxu0 0.0
        %548 = vmatprep.subr.mxu0 0.0
        %549 = vmatpush1.msra.mxu0 0.0
        %550 = vmatprep.subr.mxu0 0.0
        %551 = vmatpush1.msra.mxu0 0.0
        %552 = vmatprep.subr.mxu0 0.0
        %553 = vmatpush1.msra.mxu0 0.0
        %554 = vmatprep.subr.mxu0 0.0
        %555 = vmatpush1.msra.mxu0 0.0
        %556 = vmatprep.subr.mxu0 0.0
        %557 = vmatpush1.msra.mxu0 0.0
        %558 = vmatprep.subr.mxu0 0.0
        %559 = vmatpush1.msra.mxu0 0.0
        %560 = vmatprep.subr.mxu0 0.0
        %561 = vmatpush1.msra.mxu0 0.0
        %562 = vmatprep.subr.mxu0 0.0
        %563 = vmatpush1.msra.mxu0 0.0
        %564 = vmatprep.subr.mxu0 0.0
        %565 = vmatpush1.msra.mxu0 0.0
        %566 = vmatprep.subr.mxu0 0.0
        %567 = vmatpush1.msra.mxu0 0.0
        %568 = vmatprep.subr.mxu0 0.0
        %569 = vmatpush1.msra.mxu0 0.0
        %570 = vmatprep.subr.mxu0 0.0
        %571 = vmatpush1.msra.mxu0 0.0
        %572 = vmatprep.mubr.f32.mxu0 0.0
        %573 = vmatmul.mubr.f32.gmra.mrb[0].mxu0 %v506
        %v574 = vpop.f32.mrb[0].mxu0
        %v575 = vadd.f32 0.0, %v574
        %v576 = vpop.f32.mrb[0].mxu0
        %577 = vdwg.mxu0
        %v579 = vsel %vm334, %v502, 0
        %581 = vmatprep.subr.mxu0 0.0
        %582 = vmatpush1.msra.mxu0 %v504
        %583 = vmatprep.subr.mxu0 0.0
        %584 = vmatpush1.msra.mxu0 0.0
        %585 = vmatprep.subr.mxu0 0.0
        %586 = vmatpush1.msra.mxu0 0.0
        %587 = vmatprep.subr.mxu0 0.0
        %588 = vmatpush1.msra.mxu0 0.0
        %589 = vmatprep.subr.mxu0 0.0
        %590 = vmatpush1.msra.mxu0 0.0
        %591 = vmatprep.subr.mxu0 0.0
        %592 = vmatpush1.msra.mxu0 0.0
        %593 = vmatprep.subr.mxu0 0.0
        %594 = vmatpush1.msra.mxu0 0.0
        %595 = vmatprep.subr.mxu0 0.0
        %596 = vmatpush1.msra.mxu0 0.0
        %597 = vmatprep.subr.mxu0 0.0
        %598 = vmatpush1.msra.mxu0 0.0
        %599 = vmatprep.subr.mxu0 0.0
        %600 = vmatpush1.msra.mxu0 0.0
        %601 = vmatprep.subr.mxu0 0.0
        %602 = vmatpush1.msra.mxu0 0.0
        %603 = vmatprep.subr.mxu0 0.0
        %604 = vmatpush1.msra.mxu0 0.0
        %605 = vmatprep.subr.mxu0 0.0
        %606 = vmatpush1.msra.mxu0 0.0
        %607 = vmatprep.subr.mxu0 0.0
        %608 = vmatpush1.msra.mxu0 0.0
        %609 = vmatprep.subr.mxu0 0.0
        %610 = vmatpush1.msra.mxu0 0.0
        %611 = vmatprep.subr.mxu0 0.0
        %612 = vmatpush1.msra.mxu0 0.0
        %613 = vmatprep.subr.mxu0 0.0
        %614 = vmatpush1.msra.mxu0 0.0
        %615 = vmatprep.subr.mxu0 0.0
        %616 = vmatpush1.msra.mxu0 0.0
        %617 = vmatprep.subr.mxu0 0.0
        %618 = vmatpush1.msra.mxu0 0.0
        %619 = vmatprep.subr.mxu0 0.0
        %620 = vmatpush1.msra.mxu0 0.0
        %621 = vmatprep.subr.mxu0 0.0
        %622 = vmatpush1.msra.mxu0 0.0
        %623 = vmatprep.subr.mxu0 0.0
        %624 = vmatpush1.msra.mxu0 0.0
        %625 = vmatprep.subr.mxu0 0.0
        %626 = vmatpush1.msra.mxu0 0.0
        %627 = vmatprep.subr.mxu0 0.0
        %628 = vmatpush1.msra.mxu0 0.0
        %629 = vmatprep.subr.mxu0 0.0
        %630 = vmatpush1.msra.mxu0 0.0
        %631 = vmatprep.subr.mxu0 0.0
        %632 = vmatpush1.msra.mxu0 0.0
        %633 = vmatprep.subr.mxu0 0.0
        %634 = vmatpush1.msra.mxu0 0.0
        %635 = vmatprep.subr.mxu0 0.0
        %636 = vmatpush1.msra.mxu0 0.0
        %637 = vmatprep.subr.mxu0 0.0
        %638 = vmatpush1.msra.mxu0 0.0
        %639 = vmatprep.subr.mxu0 0.0
        %640 = vmatpush1.msra.mxu0 0.0
        %641 = vmatprep.subr.mxu0 0.0
        %642 = vmatpush1.msra.mxu0 0.0
        %643 = vmatprep.subr.mxu0 0.0
        %644 = vmatpush1.msra.mxu0 0.0
        %645 = vmatprep.mubr.f32.mxu0 0.0
        %646 = vmatmul.mubr.f32.gmra.mrb[0].mxu0 %v579
        %v647 = vpop.f32.mrb[0].mxu0
        %v648 = vadd.f32 0.0, %v647
        %v649 = vpop.f32.mrb[0].mxu0
        %650 = vdwg.mxu0
        %651 = vst.msk [vmem:[%s322] sm:$0xff] %vm334, %v501
        %652 = vst.msk [vmem:[%s322 + $0x8] sm:$0xff] %vm334, %v502
        %653 = vst.msk [vmem:[%s315] sm:$0xff] %vm334, %v575
        %654 = vst.msk [vmem:[%s315 + $0x8] sm:$0xff] %vm334, %v648
        %s655 = sand.u32 %s130, 1
        %s656 = scalar_lea.sflag [#allocation4], %s655
        %s657 = sand.u32 %s130, 1
        %s658 = smul.addr %s657, 16
        %s659 = scalar_lea.vmem [#allocation8], %s658
        %s660 = sand.u32 %s158, 1
        %s661 = scalar_lea.sflag [#allocation10], %s660
        %s662 = sand.u32 %s158, 1
        %s663 = smul.addr %s662, 16
        %s664 = scalar_lea.vmem [#allocation9], %s663
        // Predicated region
        $region45: #{tpu_custom_call.1} parent=31 // pred_check
          %p665 = pneg %p140
        $region46: #{tpu_custom_call.1} parent=31 // pred_check_branch
          %667 = sbr.rel (%p665) target = $region48
        $region47: #{tpu_custom_call.1} parent=31 // pred_region
          %s668 = smul.u32 2, %s32
          %s670 = ssub.s32 256, 256
          %671 = vsyncadd %s656, %s670
          %s672 = sadd.s32 %s33, %s668
          %s673 = smul.addr %s672, 128
          %s674 = scalar_lea.hbm %s3, %s673
          %s675 = sshll.u32 %s659, 4
          %s676 = int_to_ptr.vmem [resolvable:$true] %s675
          %681 = dma.vmem_to_hbm [thread:$0]  %s676, 256, %s674, %s656, 128, 128, 8
        $region48: #{tpu_custom_call.1} parent=31 // pred_fallthru
          _
        // Predicated region
        $region49: #{tpu_custom_call.1} parent=31 // pred_check
          %p682 = pneg %p168
        $region50: #{tpu_custom_call.1} parent=31 // pred_check_branch
          %684 = sbr.rel (%p682) target = $region52
        $region51: #{tpu_custom_call.1} parent=31 // pred_region
          %s685 = smul.u32 2, %s32
          %s687 = ssub.s32 256, 256
          %688 = vsyncadd %s661, %s687
          %s689 = sadd.s32 %s33, %s685
          %s690 = smul.addr %s689, 128
          %s691 = scalar_lea.hbm %s4, %s690
          %s692 = sshll.u32 %s664, 4
          %s693 = int_to_ptr.vmem [resolvable:$true] %s692
          %698 = dma.vmem_to_hbm [thread:$0]  %s693, 256, %s691, %s661, 128, 128, 8
        $region52: #{tpu_custom_call.1} parent=31 // pred_fallthru
          _
      $region32: #{tpu_custom_call.1} parent=5 // pred_fallthru
        _
      %p699 = scmp.le.s32.totalorder 2, %s23
      // Predicated region
      $region53: #{tpu_custom_call.1} parent=5 // pred_check
        %p700 = pneg %p699
      $region54: #{tpu_custom_call.1} parent=5 // pred_check_branch
        %702 = sbr.rel (%p700) target = $region56
      $region55: #{tpu_custom_call.1} parent=5 // pred_region
        %s703 = ssub.s32 %s23, 2
        // Predicated region
        $region57: #{tpu_custom_call.1} parent=55 // pred_check
          %p704 = pneg %p146
        $region58: #{tpu_custom_call.1} parent=55 // pred_check_branch
          %706 = sbr.rel (%p704) target = $region60
        $region59: #{tpu_custom_call.1} parent=55 // pred_region
          %s707 = sand.u32 %s131, 1
          %s708 = scalar_lea.sflag [#allocation4], %s707
          %s709 = sand.u32 %s131, 1
          %s710 = smul.addr %s709, 16
          %s711 = scalar_lea.vmem [#allocation8], %s710
          %712 = dma.done %s708, 256
        $region60: #{tpu_custom_call.1} parent=55 // pred_fallthru
          _
        // Predicated region
        $region61: #{tpu_custom_call.1} parent=55 // pred_check
          %p713 = pneg %p174
        $region62: #{tpu_custom_call.1} parent=55 // pred_check_branch
          %715 = sbr.rel (%p713) target = $region64
        $region63: #{tpu_custom_call.1} parent=55 // pred_region
          %s716 = sand.u32 %s159, 1
          %s717 = scalar_lea.sflag [#allocation10], %s716
          %s718 = sand.u32 %s159, 1
          %s719 = smul.addr %s718, 16
          %s720 = scalar_lea.vmem [#allocation9], %s719
          %721 = dma.done %s717, 256
        $region64: #{tpu_custom_call.1} parent=55 // pred_fallthru
          _
      $region56: #{tpu_custom_call.1} parent=5 // pred_fallthru
        _
    $region6: #{tpu_custom_call.1} parent=1 // loop_footer
      %s27 = sadd.s32 1, %s23
    $region7: #{tpu_custom_call.1} parent=1 // loop_footer_branch
      %22 = sbr.rel target = $region3
    $region8: #{tpu_custom_call.1} parent=1 // loop_exit
      _
    %722 = vsyncpa [#allocation3], 1
    %s723 = scalar_lea.sflag [#allocation3], 1
    %724 = vsyncpa %s723, 1
    %725 = vsyncpa [#allocation6], 1
    %s726 = scalar_lea.sflag [#allocation6], 1
    %727 = vsyncpa %s726, 1
    %728 = vsyncpa [#allocation4], 1
    %s729 = scalar_lea.sflag [#allocation4], 1
    %730 = vsyncpa %s729, 1
    %731 = vsyncpa [#allocation10], 1
    %s732 = scalar_lea.sflag [#allocation10], 1
    %733 = vsyncpa %s732, 1

</llo_original>
